<compile_context>
chip_gen: v7x
topology: tpu7x:2x2x1
jax: 0.10.0
libtpu: 0.0.40
codegen_flags: <defaults>
</compile_context>

<pallas_src>
import functools

import jax
import jax.numpy as jnp
from jax.experimental import pallas as pl
from jax.experimental.pallas import tpu as pltpu


# ----------------------------------------------------------------------------
# Pallas kernels
# ----------------------------------------------------------------------------

def _pool_sum_kernel(x_ref, o_ref):
    """Accumulate row sums of a (TR, TL) tile into the resident (TR, 1) output."""
    j = pl.program_id(1)

    @pl.when(j == 0)
    def _():
        o_ref[...] = jnp.zeros_like(o_ref)

    o_ref[...] += jnp.sum(x_ref[...], axis=-1, keepdims=True)


def _gate_kernel(p_ref, w1_ref, b1_ref, w2_ref, b2_ref, o_ref, *, res):
    """gate = sigmoid(relu(p @ W1 + b1) @ W2 + b2); +1 if residual form."""
    h = jnp.dot(p_ref[...], w1_ref[...], preferred_element_type=jnp.float32)
    h = jnp.maximum(h + b1_ref[...], 0.0)
    g = jnp.dot(h, w2_ref[...], preferred_element_type=jnp.float32) + b2_ref[...]
    g = 1.0 / (1.0 + jnp.exp(-g))          # sigmoid (exp on EUP)
    if res:
        g = g + 1.0
    o_ref[...] = g


def _apply_kernel(x_ref, g_ref, o_ref):
    """out = x * gate, gate is one scalar per row (broadcast across lanes)."""
    o_ref[...] = x_ref[...] * g_ref[...]


# ----------------------------------------------------------------------------
# Wrappers
# ----------------------------------------------------------------------------

def _round_up(n, m):
    return ((n + m - 1) // m) * m


def _spatial_sum(x2d, tr, tl):
    """x2d: (Rp, Lp) -> (Rp, 1) row sums. Rp % tr == 0, Lp % tl == 0."""
    Rp, Lp = x2d.shape
    return pl.pallas_call(
        _pool_sum_kernel,
        grid=(Rp // tr, Lp // tl),
        in_specs=[pl.BlockSpec((tr, tl), lambda i, j: (i, j))],
        out_specs=pl.BlockSpec((tr, 1), lambda i, j: (i, 0)),
        out_shape=jax.ShapeDtypeStruct((Rp, 1), jnp.float32),
        compiler_params=pltpu.CompilerParams(
            dimension_semantics=("parallel", "arbitrary")),
    )(x2d)


def _gate(pooled, w1, b1, w2, b2, res):
    """pooled: (B, C) -> gate (B, C). Tiny single-step kernel."""
    B, C = pooled.shape
    Cr = w1.shape[1]
    return pl.pallas_call(
        functools.partial(_gate_kernel, res=res),
        grid=(1,),
        in_specs=[
            pl.BlockSpec((B, C), lambda i: (0, 0)),
            pl.BlockSpec((C, Cr), lambda i: (0, 0)),
            pl.BlockSpec((1, Cr), lambda i: (0, 0)),
            pl.BlockSpec((Cr, C), lambda i: (0, 0)),
            pl.BlockSpec((1, C), lambda i: (0, 0)),
        ],
        out_specs=pl.BlockSpec((B, C), lambda i: (0, 0)),
        out_shape=jax.ShapeDtypeStruct((B, C), jnp.float32),
    )(pooled, w1, b1.reshape(1, Cr), w2, b2.reshape(1, C))


def _apply_gate(x2d, gate_col, tr, tl):
    """x2d: (Rp, Lp), gate_col: (Rp, 1) -> (Rp, Lp)."""
    Rp, Lp = x2d.shape
    return pl.pallas_call(
        _apply_kernel,
        grid=(Rp // tr, Lp // tl),
        in_specs=[
            pl.BlockSpec((tr, tl), lambda i, j: (i, j)),
            pl.BlockSpec((tr, 1), lambda i, j: (i, 0)),
        ],
        out_specs=pl.BlockSpec((tr, tl), lambda i, j: (i, j)),
        out_shape=jax.ShapeDtypeStruct((Rp, Lp), jnp.float32),
        compiler_params=pltpu.CompilerParams(
            dimension_semantics=("parallel", "parallel")),
    )(x2d, gate_col)


def ca_forward(x, params, *, res=True):
    """Channel Attention forward. x: (B, C, H, W) NCHW, same as PyTorch."""
    B, C, H, W = x.shape
    HW = H * W
    R = B * C

    w1, b1 = params["w1"], params["b1"]   # (C, C//r), (C//r,)
    w2, b2 = params["w2"], params["b2"]   # (C//r, C), (C,)

    x2 = x.reshape(R, HW).astype(jnp.float32)

    # Tile selection: lane-dense spatial tile (multiple of 128) and a row tile
    # large enough to amortize per-grid-step overhead; pad the grid instead of
    # falling back to a single whole-array block.
    TL = 2048 if HW >= 2048 else _round_up(HW, 128)
    TR = 256 if R >= 256 else _round_up(R, 8)
    Lp = _round_up(HW, TL)
    Rp = _round_up(R, TR)
    if (Rp, Lp) != (R, HW):
        x2 = jnp.pad(x2, ((0, Rp - R), (0, Lp - HW)))

    # 1. global average pool (divide by the true spatial count, not padded)
    pooled = _spatial_sum(x2, TR, TL)[:R, 0].reshape(B, C) * (1.0 / HW)

    # 2. squeeze / excite gate (already includes the "+1" when res=True)
    gate = _gate(pooled, w1, b1, w2, b2, res)           # (B, C)

    # 3. broadcast multiply
    gate_col = gate.reshape(R, 1)
    if Rp != R:
        gate_col = jnp.pad(gate_col, ((0, Rp - R), (0, 0)))
    out = _apply_gate(x2, gate_col, TR, TL)[:R, :HW]
    return out.reshape(B, C, H, W)


# ----------------------------------------------------------------------------
# Pure-JAX reference (for correctness check only)
# ----------------------------------------------------------------------------

def ca_reference(x, params, *, res=True):
    pooled = jnp.mean(x, axis=(2, 3))                               # (B, C)
    h = jnp.maximum(pooled @ params["w1"] + params["b1"], 0.0)
    g = jax.nn.sigmoid(h @ params["w2"] + params["b2"])             # (B, C)
    g = g[:, :, None, None]
    return x * (1.0 + g) if res else x * g


# ----------------------------------------------------------------------------
# Main
# ----------------------------------------------------------------------------

if __name__ == "__main__":
    B, nf, H, W = 2, 32, 16, 16
    reduction = 8
    Cr = max(1, nf // reduction)

    key = jax.random.PRNGKey(0)
    k_x, k1, k2, k3, k4 = jax.random.split(key, 5)
    x = jax.random.normal(k_x, (B, nf, H, W), jnp.float32)
    params = dict(
        w1=jax.random.normal(k1, (nf, Cr), jnp.float32) * 0.1,
        b1=jax.random.normal(k2, (Cr,), jnp.float32) * 0.01,
        w2=jax.random.normal(k3, (Cr, nf), jnp.float32) * 0.1,
        b2=jax.random.normal(k4, (nf,), jnp.float32) * 0.01,
    )

    fwd = jax.jit(functools.partial(ca_forward, res=True))
    out = jax.block_until_ready(fwd(x, params))

    ref = ca_reference(x, params, res=True)
    assert out.shape == x.shape, out.shape
    assert bool(jnp.all(jnp.isfinite(out)))
    max_err = float(jnp.max(jnp.abs(out - ref)))
    assert max_err < 1e-3, max_err
    print("KERNEL_OK")
</pallas_src>

<mosaic_0001>
module attributes {stable_mosaic.version = 11 : i64} {
  func.func @_pool_sum_kernel(%arg0: i32, %arg1: i32, %arg2: memref<64x256xf32, #tpu.memory_space<vmem>>, %arg3: memref<64x1xf32, #tpu.memory_space<vmem>>) attributes {dimension_semantics = [#tpu.dimension_semantics<parallel>, #tpu.dimension_semantics<arbitrary>], iteration_bounds = array<i64: 1, 1>, scalar_prefetch = 0 : i64, scratch_operands = 0 : i64, tpu.core_type = #tpu.core_type<tc>, window_params = [{transform_indices = @transform_0, window_bounds = array<i64: 64, 256>}, {transform_indices = @transform_1, window_bounds = array<i64: 64, 1>}]} {
    %c0_i32 = arith.constant 0 : i32
    %0 = arith.cmpi eq, %arg1, %c0_i32 : i32
    %1 = arith.extui %0 : i1 to i32
    %c0_i32_0 = arith.constant 0 : i32
    %2 = arith.cmpi ne, %1, %c0_i32_0 : i32
    scf.if %2 {
      %cst_6 = arith.constant 0.000000e+00 : f32
      %9 = vector.broadcast %cst_6 : f32 to vector<64x1xf32>
      %c0_7 = arith.constant 0 : index
      %c0_8 = arith.constant 0 : index
      %10 = vector.load %arg3[%c0_7, %c0_8] : memref<64x1xf32, #tpu.memory_space<vmem>>, vector<64x1xf32>
      tpu.vector_store %arg3[%c0_7, %c0_8], %9 {strides = array<i32>} : memref<64x1xf32, #tpu.memory_space<vmem>>, vector<64x1xf32>,
    } else {
    }
    %c0 = arith.constant 0 : index
    %c0_1 = arith.constant 0 : index
    %3 = vector.load %arg3[%c0, %c0_1] : memref<64x1xf32, #tpu.memory_space<vmem>>, vector<64x1xf32>
    %c0_2 = arith.constant 0 : index
    %c0_3 = arith.constant 0 : index
    %4 = vector.load %arg2[%c0_2, %c0_3] : memref<64x256xf32, #tpu.memory_space<vmem>>, vector<64x256xf32>
    %cst = arith.constant dense<0.000000e+00> : vector<64xf32>
    %5 = vector.multi_reduction <add>, %4, %cst [1] : vector<64x256xf32> to vector<64xf32>
    %6 = vector.shape_cast %5 : vector<64xf32> to vector<64x1xf32>
    %7 = arith.addf %3, %6 : vector<64x1xf32>
    %c0_4 = arith.constant 0 : index
    %c0_5 = arith.constant 0 : index
    %8 = vector.load %arg3[%c0_4, %c0_5] : memref<64x1xf32, #tpu.memory_space<vmem>>, vector<64x1xf32>
    tpu.vector_store %arg3[%c0_4, %c0_5], %7 {strides = array<i32>} : memref<64x1xf32, #tpu.memory_space<vmem>>, vector<64x1xf32>,
    return
  }
  func.func @transform_0(%arg0: i32, %arg1: i32) -> (i32, i32) {
    %c0_i32 = arith.constant 0 : i32
    return %arg0, %arg1 : i32, i32
  }
  func.func @transform_1(%arg0: i32, %arg1: i32) -> (i32, i32) {
    %c0_i32 = arith.constant 0 : i32
    %c0_i32_0 = arith.constant 0 : i32
    return %arg0, %c0_i32 : i32, i32
  }
}

module attributes {stable_mosaic.version = 11 : i64} {
  func.func @_gate_kernel(%arg0: i32, %arg1: memref<2x32xf32, #tpu.memory_space<vmem>>, %arg2: memref<32x4xf32, #tpu.memory_space<vmem>>, %arg3: memref<1x4xf32, #tpu.memory_space<vmem>>, %arg4: memref<4x32xf32, #tpu.memory_space<vmem>>, %arg5: memref<1x32xf32, #tpu.memory_space<vmem>>, %arg6: memref<2x32xf32, #tpu.memory_space<vmem>>) attributes {dimension_semantics = [#tpu.dimension_semantics<arbitrary>], iteration_bounds = array<i64: 1>, scalar_prefetch = 0 : i64, scratch_operands = 0 : i64, tpu.core_type = #tpu.core_type<tc>, window_params = [{pipeline_mode = #tpu.pipeline_mode<synchronous>, transform_indices = @transform_0, window_bounds = array<i64: 2, 32>}, {pipeline_mode = #tpu.pipeline_mode<synchronous>, transform_indices = @transform_1, window_bounds = array<i64: 32, 4>}, {pipeline_mode = #tpu.pipeline_mode<synchronous>, transform_indices = @transform_2, window_bounds = array<i64: 1, 4>}, {pipeline_mode = #tpu.pipeline_mode<synchronous>, transform_indices = @transform_3, window_bounds = array<i64: 4, 32>}, {pipeline_mode = #tpu.pipeline_mode<synchronous>, transform_indices = @transform_4, window_bounds = array<i64: 1, 32>}, {pipeline_mode = #tpu.pipeline_mode<synchronous>, transform_indices = @transform_5, window_bounds = array<i64: 2, 32>}]} {
    %c0 = arith.constant 0 : index
    %c0_0 = arith.constant 0 : index
    %0 = vector.load %arg1[%c0, %c0_0] : memref<2x32xf32, #tpu.memory_space<vmem>>, vector<2x32xf32>
    %c0_1 = arith.constant 0 : index
    %c0_2 = arith.constant 0 : index
    %1 = vector.load %arg2[%c0_1, %c0_2] : memref<32x4xf32, #tpu.memory_space<vmem>>, vector<32x4xf32>
    %cst = arith.constant dense<0.000000e+00> : vector<2x4xf32>
    %2 = tpu.matmul %0, %1, %cst {dimension_numbers = #tpu.dot_dimension_numbers<[1], [0], [0], [1], [0, 0, 1, 1], [], []>} : vector<2x32xf32>, vector<32x4xf32>, vector<2x4xf32> -> vector<2x4xf32>
    %c0_3 = arith.constant 0 : index
    %c0_4 = arith.constant 0 : index
    %3 = vector.load %arg3[%c0_3, %c0_4] : memref<1x4xf32, #tpu.memory_space<vmem>>, vector<1x4xf32>
    %4 = vector.broadcast %3 : vector<1x4xf32> to vector<2x4xf32>
    %5 = arith.addf %2, %4 : vector<2x4xf32>
    %cst_5 = arith.constant 0.000000e+00 : f32
    %6 = vector.broadcast %cst_5 : f32 to vector<2x4xf32>
    %7 = arith.maximumf %5, %6 : vector<2x4xf32>
    %c0_6 = arith.constant 0 : index
    %c0_7 = arith.constant 0 : index
    %8 = vector.load %arg4[%c0_6, %c0_7] : memref<4x32xf32, #tpu.memory_space<vmem>>, vector<4x32xf32>
    %cst_8 = arith.constant dense<0.000000e+00> : vector<2x32xf32>
    %9 = tpu.matmul %7, %8, %cst_8 {dimension_numbers = #tpu.dot_dimension_numbers<[1], [0], [0], [1], [0, 0, 1, 1], [], []>} : vector<2x4xf32>, vector<4x32xf32>, vector<2x32xf32> -> vector<2x32xf32>
    %c0_9 = arith.constant 0 : index
    %c0_10 = arith.constant 0 : index
    %10 = vector.load %arg5[%c0_9, %c0_10] : memref<1x32xf32, #tpu.memory_space<vmem>>, vector<1x32xf32>
    %11 = vector.broadcast %10 : vector<1x32xf32> to vector<2x32xf32>
    %12 = arith.addf %9, %11 : vector<2x32xf32>
    %cst_11 = arith.constant 0.000000e+00 : f32
    %13 = vector.broadcast %cst_11 : f32 to vector<2x32xf32>
    %14 = arith.subf %13, %12 : vector<2x32xf32>
    %15 = math.exp %14 : vector<2x32xf32>
    %cst_12 = arith.constant 1.000000e+00 : f32
    %16 = vector.broadcast %cst_12 : f32 to vector<2x32xf32>
    %17 = arith.addf %16, %15 : vector<2x32xf32>
    %cst_13 = arith.constant 1.000000e+00 : f32
    %18 = vector.broadcast %cst_13 : f32 to vector<2x32xf32>
    %19 = arith.divf %18, %17 : vector<2x32xf32>
    %cst_14 = arith.constant 1.000000e+00 : f32
    %20 = vector.broadcast %cst_14 : f32 to vector<2x32xf32>
    %21 = arith.addf %19, %20 : vector<2x32xf32>
    %c0_15 = arith.constant 0 : index
    %c0_16 = arith.constant 0 : index
    %22 = vector.load %arg6[%c0_15, %c0_16] : memref<2x32xf32, #tpu.memory_space<vmem>>, vector<2x32xf32>
    tpu.vector_store %arg6[%c0_15, %c0_16], %21 {strides = array<i32>} : memref<2x32xf32, #tpu.memory_space<vmem>>, vector<2x32xf32>,
    return
  }
  func.func @transform_0(%arg0: i32) -> (i32, i32) {
    %c0_i32 = arith.constant 0 : i32
    %c0_i32_0 = arith.constant 0 : i32
    %c0_i32_1 = arith.constant 0 : i32
    return %c0_i32, %c0_i32_0 : i32, i32
  }
  func.func @transform_1(%arg0: i32) -> (i32, i32) {
    %c0_i32 = arith.constant 0 : i32
    %c0_i32_0 = arith.constant 0 : i32
    %c0_i32_1 = arith.constant 0 : i32
    return %c0_i32, %c0_i32_0 : i32, i32
  }
  func.func @transform_2(%arg0: i32) -> (i32, i32) {
    %c0_i32 = arith.constant 0 : i32
    %c0_i32_0 = arith.constant 0 : i32
    %c0_i32_1 = arith.constant 0 : i32
    return %c0_i32, %c0_i32_0 : i32, i32
  }
  func.func @transform_3(%arg0: i32) -> (i32, i32) {
    %c0_i32 = arith.constant 0 : i32
    %c0_i32_0 = arith.constant 0 : i32
    %c0_i32_1 = arith.constant 0 : i32
    return %c0_i32, %c0_i32_0 : i32, i32
  }
  func.func @transform_4(%arg0: i32) -> (i32, i32) {
    %c0_i32 = arith.constant 0 : i32
    %c0_i32_0 = arith.constant 0 : i32
    %c0_i32_1 = arith.constant 0 : i32
    return %c0_i32, %c0_i32_0 : i32, i32
  }
  func.func @transform_5(%arg0: i32) -> (i32, i32) {
    %c0_i32 = arith.constant 0 : i32
    %c0_i32_0 = arith.constant 0 : i32
    %c0_i32_1 = arith.constant 0 : i32
    return %c0_i32, %c0_i32_0 : i32, i32
  }
}

module attributes {stable_mosaic.version = 11 : i64} {
  func.func @_apply_kernel(%arg0: i32, %arg1: i32, %arg2: memref<64x256xf32, #tpu.memory_space<vmem>>, %arg3: memref<64x1xf32, #tpu.memory_space<vmem>>, %arg4: memref<64x256xf32, #tpu.memory_space<vmem>>) attributes {dimension_semantics = [#tpu.dimension_semantics<parallel>, #tpu.dimension_semantics<parallel>], iteration_bounds = array<i64: 1, 1>, scalar_prefetch = 0 : i64, scratch_operands = 0 : i64, tpu.core_type = #tpu.core_type<tc>, window_params = [{transform_indices = @transform_0, window_bounds = array<i64: 64, 256>}, {transform_indices = @transform_1, window_bounds = array<i64: 64, 1>}, {transform_indices = @transform_2, window_bounds = array<i64: 64, 256>}]} {
    %c0 = arith.constant 0 : index
    %c0_0 = arith.constant 0 : index
    %0 = vector.load %arg2[%c0, %c0_0] : memref<64x256xf32, #tpu.memory_space<vmem>>, vector<64x256xf32>
    %c0_1 = arith.constant 0 : index
    %c0_2 = arith.constant 0 : index
    %1 = vector.load %arg3[%c0_1, %c0_2] : memref<64x1xf32, #tpu.memory_space<vmem>>, vector<64x1xf32>
    %2 = vector.broadcast %1 : vector<64x1xf32> to vector<64x256xf32>
    %3 = arith.mulf %0, %2 : vector<64x256xf32>
    %c0_3 = arith.constant 0 : index
    %c0_4 = arith.constant 0 : index
    %4 = vector.load %arg4[%c0_3, %c0_4] : memref<64x256xf32, #tpu.memory_space<vmem>>, vector<64x256xf32>
    tpu.vector_store %arg4[%c0_3, %c0_4], %3 {strides = array<i32>} : memref<64x256xf32, #tpu.memory_space<vmem>>, vector<64x256xf32>,
    return
  }
  func.func @transform_0(%arg0: i32, %arg1: i32) -> (i32, i32) {
    %c0_i32 = arith.constant 0 : i32
    return %arg0, %arg1 : i32, i32
  }
  func.func @transform_1(%arg0: i32, %arg1: i32) -> (i32, i32) {
    %c0_i32 = arith.constant 0 : i32
    %c0_i32_0 = arith.constant 0 : i32
    return %arg0, %c0_i32 : i32, i32
  }
  func.func @transform_2(%arg0: i32, %arg1: i32) -> (i32, i32) {
    %c0_i32 = arith.constant 0 : i32
    return %arg0, %arg1 : i32, i32
  }
}

</mosaic_0001>

<llo_original>
// kernel: ca_forward.3
$region0: #{ca_forward.3}
  #allocation0 [shape = 'u32[]', space=smem, size = 0x4, offset = 0x4, fixed_abs, tag = 'smem constant byte address 0x4 - core index']
  #allocation1 [shape = 'u32[144,128]{1,0:T(1,128)}', space=vmem, size = 0x12000, scoped, tag = 'internal scratch']
  %s0 = inlined_call_operand.vmem [shape: f32[64,256], index: 0, kind: input, shape index: {}]
  %s1 = inlined_call_operand.vmem [shape: f32[64,1], index: 1, kind: output, shape index: {}]
  %s2 = sld [smem:[#allocation0]]
  $region18: #{ca_forward.3} parent=0
    _
  %s4 = ssub.s32 1, %s2
  %s5 = scalar_select 0, %s4, %s2
  // Predicated region
  $region2: #{ca_forward.3} parent=0 // pred_check
    _
  $region3: #{ca_forward.3} parent=0 // pred_check_branch
    %7 = sbr.rel (0) target = $region5
  $region4: #{ca_forward.3} parent=0 // pred_region
    _
  $region5: #{ca_forward.3} parent=0 // pred_fallthru
    _
  %p8 = scmp.eq.s32.totalorder 0, 0
  // Predicated region
  $region6: #{ca_forward.3} parent=0 // pred_check
    %p9 = pneg %p8
  $region7: #{ca_forward.3} parent=0 // pred_check_branch
    %11 = sbr.rel (%p9) target = $region9
  $region8: #{ca_forward.3} parent=0 // pred_region
    %vm12 = vcmask 7168
    %13 = vst.msk [vmem:[%s1] sm:$0xff] %vm12, 0.0
    %14 = vst.msk [vmem:[%s1 + $0x8] sm:$0xff] %vm12, 0.0
    %15 = vst.msk [vmem:[%s1 + $0x10] sm:$0xff] %vm12, 0.0
    %16 = vst.msk [vmem:[%s1 + $0x18] sm:$0xff] %vm12, 0.0
    %17 = vst.msk [vmem:[%s1 + $0x20] sm:$0xff] %vm12, 0.0
    %18 = vst.msk [vmem:[%s1 + $0x28] sm:$0xff] %vm12, 0.0
    %19 = vst.msk [vmem:[%s1 + $0x30] sm:$0xff] %vm12, 0.0
    %20 = vst.msk [vmem:[%s1 + $0x38] sm:$0xff] %vm12, 0.0
  $region9: #{ca_forward.3} parent=0 // pred_fallthru
    _
  %v21 = vld [vmem:[%s1] sm:$0xff]
  %v22 = vld [vmem:[%s1 + $0x8] sm:$0xff]
  %v23 = vld [vmem:[%s1 + $0x10] sm:$0xff]
  %v24 = vld [vmem:[%s1 + $0x18] sm:$0xff]
  %v25 = vld [vmem:[%s1 + $0x20] sm:$0xff]
  %v26 = vld [vmem:[%s1 + $0x28] sm:$0xff]
  %v27 = vld [vmem:[%s1 + $0x30] sm:$0xff]
  %v28 = vld [vmem:[%s1 + $0x38] sm:$0xff]
  %v29 = vld [vmem:[%s0] sm:$0xff]
  %v30 = vld [vmem:[%s0 + $0x8] sm:$0xff]
  %v31 = vld [vmem:[%s0 + $0x10] sm:$0xff]
  %v32 = vld [vmem:[%s0 + $0x18] sm:$0xff]
  %v33 = vld [vmem:[%s0 + $0x20] sm:$0xff]
  %v34 = vld [vmem:[%s0 + $0x28] sm:$0xff]
  %v35 = vld [vmem:[%s0 + $0x30] sm:$0xff]
  %v36 = vld [vmem:[%s0 + $0x38] sm:$0xff]
  %v37 = vld [vmem:[%s0 + $0x40] sm:$0xff]
  %v38 = vld [vmem:[%s0 + $0x48] sm:$0xff]
  %v39 = vld [vmem:[%s0 + $0x50] sm:$0xff]
  %v40 = vld [vmem:[%s0 + $0x58] sm:$0xff]
  %v41 = vld [vmem:[%s0 + $0x60] sm:$0xff]
  %v42 = vld [vmem:[%s0 + $0x68] sm:$0xff]
  %v43 = vld [vmem:[%s0 + $0x70] sm:$0xff]
  %v44 = vld [vmem:[%s0 + $0x78] sm:$0xff]
  %v45 = vadd.f32 %v29, %v30
  %46 = vadd.xlane.f32.xlu0 %v45
  %v47 = vpop.xlane.xlu0 %46
  %v48 = vadd.f32 %v31, %v32
  %49 = vadd.xlane.f32.xlu0 %v48
  %v50 = vpop.xlane.xlu0 %49
  %v51 = vadd.f32 %v33, %v34
  %52 = vadd.xlane.f32.xlu0 %v51
  %v53 = vpop.xlane.xlu0 %52
  %v54 = vadd.f32 %v35, %v36
  %55 = vadd.xlane.f32.xlu0 %v54
  %v56 = vpop.xlane.xlu0 %55
  %v57 = vadd.f32 %v37, %v38
  %58 = vadd.xlane.f32.xlu0 %v57
  %v59 = vpop.xlane.xlu0 %58
  %v60 = vadd.f32 %v39, %v40
  %61 = vadd.xlane.f32.xlu0 %v60
  %v62 = vpop.xlane.xlu0 %61
  %v63 = vadd.f32 %v41, %v42
  %64 = vadd.xlane.f32.xlu0 %v63
  %v65 = vpop.xlane.xlu0 %64
  %v66 = vadd.f32 %v43, %v44
  %67 = vadd.xlane.f32.xlu0 %v66
  %v68 = vpop.xlane.xlu0 %67
  %v69 = vadd.f32 %v21, %v47
  %v70 = vadd.f32 %v22, %v50
  %v71 = vadd.f32 %v23, %v53
  %v72 = vadd.f32 %v24, %v56
  %v73 = vadd.f32 %v25, %v59
  %v74 = vadd.f32 %v26, %v62
  %v75 = vadd.f32 %v27, %v65
  %v76 = vadd.f32 %v28, %v68
  %vm77 = vcmask 7168
  %78 = vst.msk [vmem:[%s1] sm:$0xff] %vm77, %v69
  %79 = vst.msk [vmem:[%s1 + $0x8] sm:$0xff] %vm77, %v70
  %80 = vst.msk [vmem:[%s1 + $0x10] sm:$0xff] %vm77, %v71
  %81 = vst.msk [vmem:[%s1 + $0x18] sm:$0xff] %vm77, %v72
  %82 = vst.msk [vmem:[%s1 + $0x20] sm:$0xff] %vm77, %v73
  %83 = vst.msk [vmem:[%s1 + $0x28] sm:$0xff] %vm77, %v74
  %84 = vst.msk [vmem:[%s1 + $0x30] sm:$0xff] %vm77, %v75
  %85 = vst.msk [vmem:[%s1 + $0x38] sm:$0xff] %vm77, %v76
  // Predicated region
  $region10: #{ca_forward.3} parent=0 // pred_check
    _
  $region11: #{ca_forward.3} parent=0 // pred_check_branch
    %87 = sbr.rel (0) target = $region13
  $region12: #{ca_forward.3} parent=0 // pred_region
    _
  $region13: #{ca_forward.3} parent=0 // pred_fallthru
    _
  // Predicated region
  $region14: #{ca_forward.3} parent=0 // pred_check
    _
  $region15: #{ca_forward.3} parent=0 // pred_check_branch
    %89 = sbr.rel (0) target = $region17
  $region16: #{ca_forward.3} parent=0 // pred_region
    _
  $region17: #{ca_forward.3} parent=0 // pred_fallthru
    _

// kernel: ca_forward.4
$region0: #{ca_forward.4}
  #allocation0 [shape = 'u32[]', space=smem, size = 0x4, offset = 0x4, fixed_abs, tag = 'smem constant byte address 0x4 - core index']
  #allocation1 [shape = 'u32[144,128]{1,0:T(1,128)}', space=vmem, size = 0x12000, scoped, tag = 'internal scratch']
  %s0 = inlined_call_operand.vmem [shape: f32[2,32], index: 0, kind: input, shape index: {}]
  %s1 = inlined_call_operand.vmem [shape: f32[32,4], index: 1, kind: input, shape index: {}]
  %s2 = inlined_call_operand.vmem [shape: f32[1,4], index: 2, kind: input, shape index: {}]
  %s3 = inlined_call_operand.vmem [shape: f32[4,32], index: 3, kind: input, shape index: {}]
  %s4 = inlined_call_operand.vmem [shape: f32[1,32], index: 4, kind: input, shape index: {}]
  %s5 = inlined_call_operand.vmem [shape: f32[2,32], index: 5, kind: output, shape index: {}]
  %s6 = sld [smem:[#allocation0]]
  $region30: #{ca_forward.4} parent=0
    _
  %s8 = ssub.s32 1, %s6
  %s9 = scalar_select 0, %s8, %s6
  // Predicated region
  $region2: #{ca_forward.4} parent=0 // pred_check
    _
  $region3: #{ca_forward.4} parent=0 // pred_check_branch
    %11 = sbr.rel (0) target = $region5
  $region4: #{ca_forward.4} parent=0 // pred_region
    _
  $region5: #{ca_forward.4} parent=0 // pred_fallthru
    _
  // Predicated region
  $region6: #{ca_forward.4} parent=0 // pred_check
    _
  $region7: #{ca_forward.4} parent=0 // pred_check_branch
    %13 = sbr.rel (0) target = $region9
  $region8: #{ca_forward.4} parent=0 // pred_region
    _
  $region9: #{ca_forward.4} parent=0 // pred_fallthru
    _
  // Predicated region
  $region10: #{ca_forward.4} parent=0 // pred_check
    _
  $region11: #{ca_forward.4} parent=0 // pred_check_branch
    %15 = sbr.rel (0) target = $region13
  $region12: #{ca_forward.4} parent=0 // pred_region
    _
  $region13: #{ca_forward.4} parent=0 // pred_fallthru
    _
  // Predicated region
  $region14: #{ca_forward.4} parent=0 // pred_check
    _
  $region15: #{ca_forward.4} parent=0 // pred_check_branch
    %17 = sbr.rel (0) target = $region17
  $region16: #{ca_forward.4} parent=0 // pred_region
    _
  $region17: #{ca_forward.4} parent=0 // pred_fallthru
    _
  // Predicated region
  $region18: #{ca_forward.4} parent=0 // pred_check
    _
  $region19: #{ca_forward.4} parent=0 // pred_check_branch
    %19 = sbr.rel (0) target = $region21
  $region20: #{ca_forward.4} parent=0 // pred_region
    _
  $region21: #{ca_forward.4} parent=0 // pred_fallthru
    _
  %v20 = vld [vmem:[%s0] sm:$0x3]
  %v21 = vld [vmem:[%s1] sm:$0xff]
  %v22 = vld [vmem:[%s1 + $0x8] sm:$0xff]
  %v23 = vld [vmem:[%s1 + $0x10] sm:$0xff]
  %v24 = vld [vmem:[%s1 + $0x18] sm:$0xff]
  %v25 = vld [vmem:[%s2] sm:$0x1]
  %v27 = vlaneseq
  %v28 = vshrl.u32 %v27, 7
  %v29 = vsub.s32 0, %v28
  %v30 = vrot.slane %v25, %v29
  %vm32 = vcmask 261120
  %v34 = vsel %vm32, %v20, 0
  %36 = vmatprep.subr.mxu0 0.0
  %37 = vmatpush1.msra.mxu0 %v21
  %38 = vmatprep.subr.mxu0 0.0
  %39 = vmatpush1.msra.mxu0 %v22
  %40 = vmatprep.subr.mxu0 0.0
  %41 = vmatpush1.msra.mxu0 %v23
  %42 = vmatprep.subr.mxu0 0.0
  %43 = vmatpush1.msra.mxu0 %v24
  %44 = vmatprep.subr.mxu0 0.0
  %45 = vmatpush1.msra.mxu0 0.0
  %46 = vmatprep.subr.mxu0 0.0
  %47 = vmatpush1.msra.mxu0 0.0
  %48 = vmatprep.subr.mxu0 0.0
  %49 = vmatpush1.msra.mxu0 0.0
  %50 = vmatprep.subr.mxu0 0.0
  %51 = vmatpush1.msra.mxu0 0.0
  %52 = vmatprep.subr.mxu0 0.0
  %53 = vmatpush1.msra.mxu0 0.0
  %54 = vmatprep.subr.mxu0 0.0
  %55 = vmatpush1.msra.mxu0 0.0
  %56 = vmatprep.subr.mxu0 0.0
  %57 = vmatpush1.msra.mxu0 0.0
  %58 = vmatprep.subr.mxu0 0.0
  %59 = vmatpush1.msra.mxu0 0.0
  %60 = vmatprep.subr.mxu0 0.0
  %61 = vmatpush1.msra.mxu0 0.0
  %62 = vmatprep.subr.mxu0 0.0
  %63 = vmatpush1.msra.mxu0 0.0
  %64 = vmatprep.subr.mxu0 0.0
  %65 = vmatpush1.msra.mxu0 0.0
  %66 = vmatprep.subr.mxu0 0.0
  %67 = vmatpush1.msra.mxu0 0.0
  %68 = vmatprep.subr.mxu0 0.0
  %69 = vmatpush1.msra.mxu0 0.0
  %70 = vmatprep.subr.mxu0 0.0
  %71 = vmatpush1.msra.mxu0 0.0
  %72 = vmatprep.subr.mxu0 0.0
  %73 = vmatpush1.msra.mxu0 0.0
  %74 = vmatprep.subr.mxu0 0.0
  %75 = vmatpush1.msra.mxu0 0.0
  %76 = vmatprep.subr.mxu0 0.0
  %77 = vmatpush1.msra.mxu0 0.0
  %78 = vmatprep.subr.mxu0 0.0
  %79 = vmatpush1.msra.mxu0 0.0
  %80 = vmatprep.subr.mxu0 0.0
  %81 = vmatpush1.msra.mxu0 0.0
  %82 = vmatprep.subr.mxu0 0.0
  %83 = vmatpush1.msra.mxu0 0.0
  %84 = vmatprep.subr.mxu0 0.0
  %85 = vmatpush1.msra.mxu0 0.0
  %86 = vmatprep.subr.mxu0 0.0
  %87 = vmatpush1.msra.mxu0 0.0
  %88 = vmatprep.subr.mxu0 0.0
  %89 = vmatpush1.msra.mxu0 0.0
  %90 = vmatprep.subr.mxu0 0.0
  %91 = vmatpush1.msra.mxu0 0.0
  %92 = vmatprep.subr.mxu0 0.0
  %93 = vmatpush1.msra.mxu0 0.0
  %94 = vmatprep.subr.mxu0 0.0
  %95 = vmatpush1.msra.mxu0 0.0
  %96 = vmatprep.subr.mxu0 0.0
  %97 = vmatpush1.msra.mxu0 0.0
  %98 = vmatprep.subr.mxu0 0.0
  %99 = vmatpush1.msra.mxu0 0.0
  %100 = vmatprep.mubr.f32.mxu0 0.0
  %101 = vmatmul.mubr.f32.gmra.mrb[0].mxu0 %v34
  %v102 = vpop.f32.mrb[0].mxu0
  %v103 = vadd.f32 %v30, %v102
  %v104 = vpop.f32.mrb[0].mxu0
  %105 = vdwg.mxu0
  %v106 = vmax.f32 %v103, 0.0
  %v107 = vld [vmem:[%s3] sm:$0xf]
  %v108 = vld [vmem:[%s4] sm:$0x1]
  %v110 = vlaneseq
  %v111 = vshrl.u32 %v110, 7
  %v112 = vsub.s32 0, %v111
  %v113 = vrot.slane %v108, %v112
  %vm115 = vcmask 31744
  %v117 = vsel %vm115, %v106, 0
  %vm119 = vcmask 1043456
  %v121 = vsel %vm119, %v107, 0
  %123 = vmatprep.subr.mxu0 0.0
  %124 = vmatpush1.msra.mxu0 %v121
  %125 = vmatprep.subr.mxu0 0.0
  %126 = vmatpush1.msra.mxu0 0.0
  %127 = vmatprep.subr.mxu0 0.0
  %128 = vmatpush1.msra.mxu0 0.0
  %129 = vmatprep.subr.mxu0 0.0
  %130 = vmatpush1.msra.mxu0 0.0
  %131 = vmatprep.subr.mxu0 0.0
  %132 = vmatpush1.msra.mxu0 0.0
  %133 = vmatprep.subr.mxu0 0.0
  %134 = vmatpush1.msra.mxu0 0.0
  %135 = vmatprep.subr.mxu0 0.0
  %136 = vmatpush1.msra.mxu0 0.0
  %137 = vmatprep.subr.mxu0 0.0
  %138 = vmatpush1.msra.mxu0 0.0
  %139 = vmatprep.subr.mxu0 0.0
  %140 = vmatpush1.msra.mxu0 0.0
  %141 = vmatprep.subr.mxu0 0.0
  %142 = vmatpush1.msra.mxu0 0.0
  %143 = vmatprep.subr.mxu0 0.0
  %144 = vmatpush1.msra.mxu0 0.0
  %145 = vmatprep.subr.mxu0 0.0
  %146 = vmatpush1.msra.mxu0 0.0
  %147 = vmatprep.subr.mxu0 0.0
  %148 = vmatpush1.msra.mxu0 0.0
  %149 = vmatprep.subr.mxu0 0.0
  %150 = vmatpush1.msra.mxu0 0.0
  %151 = vmatprep.subr.mxu0 0.0
  %152 = vmatpush1.msra.mxu0 0.0
  %153 = vmatprep.subr.mxu0 0.0
  %154 = vmatpush1.msra.mxu0 0.0
  %155 = vmatprep.subr.mxu0 0.0
  %156 = vmatpush1.msra.mxu0 0.0
  %157 = vmatprep.subr.mxu0 0.0
  %158 = vmatpush1.msra.mxu0 0.0
  %159 = vmatprep.subr.mxu0 0.0
  %160 = vmatpush1.msra.mxu0 0.0
  %161 = vmatprep.subr.mxu0 0.0
  %162 = vmatpush1.msra.mxu0 0.0
  %163 = vmatprep.subr.mxu0 0.0
  %164 = vmatpush1.msra.mxu0 0.0
  %165 = vmatprep.subr.mxu0 0.0
  %166 = vmatpush1.msra.mxu0 0.0
  %167 = vmatprep.subr.mxu0 0.0
  %168 = vmatpush1.msra.mxu0 0.0
  %169 = vmatprep.subr.mxu0 0.0
  %170 = vmatpush1.msra.mxu0 0.0
  %171 = vmatprep.subr.mxu0 0.0
  %172 = vmatpush1.msra.mxu0 0.0
  %173 = vmatprep.subr.mxu0 0.0
  %174 = vmatpush1.msra.mxu0 0.0
  %175 = vmatprep.subr.mxu0 0.0
  %176 = vmatpush1.msra.mxu0 0.0
  %177 = vmatprep.subr.mxu0 0.0
  %178 = vmatpush1.msra.mxu0 0.0
  %179 = vmatprep.subr.mxu0 0.0
  %180 = vmatpush1.msra.mxu0 0.0
  %181 = vmatprep.subr.mxu0 0.0
  %182 = vmatpush1.msra.mxu0 0.0
  %183 = vmatprep.subr.mxu0 0.0
  %184 = vmatpush1.msra.mxu0 0.0
  %185 = vmatprep.subr.mxu0 0.0
  %186 = vmatpush1.msra.mxu0 0.0
  %187 = vmatprep.mubr.f32.mxu0 0.0
  %188 = vmatmul.mubr.f32.gmra.mrb[0].mxu0 %v117
  %v189 = vpop.f32.mrb[0].mxu0
  %v190 = vadd.f32 %v113, %v189
  %v191 = vpop.f32.mrb[0].mxu0
  %192 = vdwg.mxu0
  %v193 = vsub.f32 0.0, %v190
  %v194 = vmul.f32 %v193, 1.442695
  %v195 = vpow.pop %v194
  %v196 = vadd.f32 %v195, 1.0
  %v197 = vrcp.pop %v196
  %v198 = vmul.f32 1.0, %v197
  %v199 = vadd.f32 %v198, 1.0
  %vm200 = vcmask 254976
  %201 = vst.msk [vmem:[%s5] sm:$0x3] %vm200, %v199
  // Predicated region
  $region22: #{ca_forward.4} parent=0 // pred_check
    _
  $region23: #{ca_forward.4} parent=0 // pred_check_branch
    %203 = sbr.rel (0) target = $region25
  $region24: #{ca_forward.4} parent=0 // pred_region
    _
  $region25: #{ca_forward.4} parent=0 // pred_fallthru
    _
  // Predicated region
  $region26: #{ca_forward.4} parent=0 // pred_check
    _
  $region27: #{ca_forward.4} parent=0 // pred_check_branch
    %205 = sbr.rel (0) target = $region29
  $region28: #{ca_forward.4} parent=0 // pred_region
    _
  $region29: #{ca_forward.4} parent=0 // pred_fallthru
    _

// kernel: ca_forward.5
$region0: #{ca_forward.5}
  #allocation0 [shape = 'u32[]', space=smem, size = 0x4, offset = 0x4, fixed_abs, tag = 'smem constant byte address 0x4 - core index']
  #allocation1 [shape = 'u32[144,128]{1,0:T(1,128)}', space=vmem, size = 0x12000, scoped, tag = 'internal scratch']
  %s0 = inlined_call_operand.vmem [shape: f32[64,256], index: 0, kind: input, shape index: {}]
  %s1 = inlined_call_operand.vmem [shape: f32[64,1], index: 1, kind: input, shape index: {}]
  %s2 = inlined_call_operand.vmem [shape: f32[64,256], index: 2, kind: output, shape index: {}]
  %s3 = sld [smem:[#allocation0]]
  $region18: #{ca_forward.5} parent=0
    _
  %s5 = ssub.s32 1, %s3
  %s6 = scalar_select 0, %s5, %s3
  // Predicated region
  $region2: #{ca_forward.5} parent=0 // pred_check
    _
  $region3: #{ca_forward.5} parent=0 // pred_check_branch
    %8 = sbr.rel (0) target = $region5
  $region4: #{ca_forward.5} parent=0 // pred_region
    _
  $region5: #{ca_forward.5} parent=0 // pred_fallthru
    _
  // Predicated region
  $region6: #{ca_forward.5} parent=0 // pred_check
    _
  $region7: #{ca_forward.5} parent=0 // pred_check_branch
    %10 = sbr.rel (0) target = $region9
  $region8: #{ca_forward.5} parent=0 // pred_region
    _
  $region9: #{ca_forward.5} parent=0 // pred_fallthru
    _
  %v11 = vld [vmem:[%s0] sm:$0xff]
  %v12 = vld [vmem:[%s0 + $0x8] sm:$0xff]
  %v13 = vld [vmem:[%s0 + $0x10] sm:$0xff]
  %v14 = vld [vmem:[%s0 + $0x18] sm:$0xff]
  %v15 = vld [vmem:[%s0 + $0x20] sm:$0xff]
  %v16 = vld [vmem:[%s0 + $0x28] sm:$0xff]
  %v17 = vld [vmem:[%s0 + $0x30] sm:$0xff]
  %v18 = vld [vmem:[%s0 + $0x38] sm:$0xff]
  %v19 = vld [vmem:[%s0 + $0x40] sm:$0xff]
  %v20 = vld [vmem:[%s0 + $0x48] sm:$0xff]
  %v21 = vld [vmem:[%s0 + $0x50] sm:$0xff]
  %v22 = vld [vmem:[%s0 + $0x58] sm:$0xff]
  %v23 = vld [vmem:[%s0 + $0x60] sm:$0xff]
  %v24 = vld [vmem:[%s0 + $0x68] sm:$0xff]
  %v25 = vld [vmem:[%s0 + $0x70] sm:$0xff]
  %v26 = vld [vmem:[%s0 + $0x78] sm:$0xff]
  %v27 = vld [vmem:[%s1] sm:$0xff]
  %v28 = vld [vmem:[%s1 + $0x8] sm:$0xff]
  %v29 = vld [vmem:[%s1 + $0x10] sm:$0xff]
  %v30 = vld [vmem:[%s1 + $0x18] sm:$0xff]
  %v31 = vld [vmem:[%s1 + $0x20] sm:$0xff]
  %v32 = vld [vmem:[%s1 + $0x28] sm:$0xff]
  %v33 = vld [vmem:[%s1 + $0x30] sm:$0xff]
  %v34 = vld [vmem:[%s1 + $0x38] sm:$0xff]
  %36 = vset.pattern.permute.xlu0 0
  %37 = vperm.xlu0 %36, %v27
  %v38 = vpop.permute.xlu0 %37
  %41 = vset.pattern.permute.xlu0 0
  %42 = vperm.xlu0 %41, %v28
  %v43 = vpop.permute.xlu0 %42
  %46 = vset.pattern.permute.xlu0 0
  %47 = vperm.xlu0 %46, %v29
  %v48 = vpop.permute.xlu0 %47
  %51 = vset.pattern.permute.xlu0 0
  %52 = vperm.xlu0 %51, %v30
  %v53 = vpop.permute.xlu0 %52
  %56 = vset.pattern.permute.xlu0 0
  %57 = vperm.xlu0 %56, %v31
  %v58 = vpop.permute.xlu0 %57
  %61 = vset.pattern.permute.xlu0 0
  %62 = vperm.xlu0 %61, %v32
  %v63 = vpop.permute.xlu0 %62
  %66 = vset.pattern.permute.xlu0 0
  %67 = vperm.xlu0 %66, %v33
  %v68 = vpop.permute.xlu0 %67
  %71 = vset.pattern.permute.xlu0 0
  %72 = vperm.xlu0 %71, %v34
  %v73 = vpop.permute.xlu0 %72
  %v75 = vmul.f32 %v11, %v38
  %v76 = vmul.f32 %v12, %v38
  %v77 = vmul.f32 %v13, %v43
  %v78 = vmul.f32 %v14, %v43
  %v79 = vmul.f32 %v15, %v48
  %v80 = vmul.f32 %v16, %v48
  %v81 = vmul.f32 %v17, %v53
  %v82 = vmul.f32 %v18, %v53
  %v83 = vmul.f32 %v19, %v58
  %v84 = vmul.f32 %v20, %v58
  %v85 = vmul.f32 %v21, %v63
  %v86 = vmul.f32 %v22, %v63
  %v87 = vmul.f32 %v23, %v68
  %v88 = vmul.f32 %v24, %v68
  %v89 = vmul.f32 %v25, %v73
  %v90 = vmul.f32 %v26, %v73
  %91 = vst [vmem:[%s2] sm:$0xff] %v75
  %92 = vst [vmem:[%s2 + $0x8] sm:$0xff] %v76
  %93 = vst [vmem:[%s2 + $0x10] sm:$0xff] %v77
  %94 = vst [vmem:[%s2 + $0x18] sm:$0xff] %v78
  %95 = vst [vmem:[%s2 + $0x20] sm:$0xff] %v79
  %96 = vst [vmem:[%s2 + $0x28] sm:$0xff] %v80
  %97 = vst [vmem:[%s2 + $0x30] sm:$0xff] %v81
  %98 = vst [vmem:[%s2 + $0x38] sm:$0xff] %v82
  %99 = vst [vmem:[%s2 + $0x40] sm:$0xff] %v83
  %100 = vst [vmem:[%s2 + $0x48] sm:$0xff] %v84
  %101 = vst [vmem:[%s2 + $0x50] sm:$0xff] %v85
  %102 = vst [vmem:[%s2 + $0x58] sm:$0xff] %v86
  %103 = vst [vmem:[%s2 + $0x60] sm:$0xff] %v87
  %104 = vst [vmem:[%s2 + $0x68] sm:$0xff] %v88
  %105 = vst [vmem:[%s2 + $0x70] sm:$0xff] %v89
  %106 = vst [vmem:[%s2 + $0x78] sm:$0xff] %v90
  // Predicated region
  $region10: #{ca_forward.5} parent=0 // pred_check
    _
  $region11: #{ca_forward.5} parent=0 // pred_check_branch
    %108 = sbr.rel (0) target = $region13
  $region12: #{ca_forward.5} parent=0 // pred_region
    _
  $region13: #{ca_forward.5} parent=0 // pred_fallthru
    _
  // Predicated region
  $region14: #{ca_forward.5} parent=0 // pred_check
    _
  $region15: #{ca_forward.5} parent=0 // pred_check_branch
    %110 = sbr.rel (0) target = $region17
  $region16: #{ca_forward.5} parent=0 // pred_region
    _
  $region17: #{ca_forward.5} parent=0 // pred_fallthru
    _

</llo_original>
